<compile_context>
chip_gen: v6e
topology: v6e:2x2x1
jax: 0.10.0
libtpu: 0.0.40
codegen_flags: <defaults>
</compile_context>

<pallas_src>
import functools
from math import gcd, pi

import jax
import jax.numpy as jnp
from jax.experimental import pallas as pl
from jax.experimental.pallas import tpu as pltpu


def _round_up(a: int, b: int) -> int:
    return ((a + b - 1) // b) * b


def _cdiv(a: int, b: int) -> int:
    return -(-a // b)


def _sine_embed_kernel(x_ref, band_ref, phase_ref, out_ref, *, groups: int):
    # x_ref:     (TR, g)     g scalars per kernel row
    # band_ref:  (g, FW)     band[j, c] = 1/dim_t[c % F] if c // F == j else 0
    # phase_ref: (1, FW)     0 for even feature (sin), pi/2 for odd (cos)
    # out_ref:   (TR, FW)    lane-dense output block (FW multiple of 128)
    x = x_ref[...]
    pos = x[:, 0:1] * band_ref[0:1, :]                  # (TR, FW) broadcast mul
    for j in range(1, groups):                          # small g, unrolled FMAs
        pos = pos + x[:, j:j + 1] * band_ref[j:j + 1, :]
    # Single transcendental per element; phase add turns odd lanes into cos.
    out_ref[...] = jnp.sin(pos + phase_ref[...]).astype(out_ref.dtype)


def scalar_embedding_sine(
    x: jax.Array,
    num_pos_feats: int = 64,
    temperature: float = 10000.0,
    normalize: bool = False,
    scale: float | None = None,
    out_dtype=jnp.float32,
) -> jax.Array:
    """JAX/Pallas equivalent of ScalarEmbeddingSine.forward: (B,H,W) -> (B,H,W,F)."""
    if scale is not None and normalize is False:
        raise ValueError("Normalize should be True if scale is passed")
    if scale is None:
        scale = 2 * pi
    # NOTE: exactly like the PyTorch forward, `normalize` / `scale` are stored
    # but never applied to the embedding; kept only for interface parity.

    f = int(num_pos_feats)
    assert f % 2 == 0, "num_pos_feats must be even (sin/cos interleave)"

    lead_shape = x.shape
    n = 1
    for d in lead_shape:
        n *= int(d)
    if n == 0:
        return jnp.zeros((*lead_shape, f), dtype=out_dtype)

    # ---- lane-dense grouping: g scalars per kernel row, FW = g*F lanes ----
    lcm = f * 128 // gcd(f, 128)
    if lcm // f <= 16:
        g = lcm // f            # F=64 -> g=2, FW=128 ; F=128 -> g=1, FW=128
        fw = lcm
        feat_pad = 0
    else:
        # TODO(synk): degenerate tiny F (>16 groups needed); use a feature-
        # padded 128-lane block and slice features outside (still unmasked vst).
        g = 1
        fw = _round_up(f, 128)
        feat_pad = fw - f
    fpad = f + feat_pad

    # ---- constants (built in plain JAX, resident in VMEM) ----
    kidx = jnp.arange(f, dtype=jnp.float32)
    dim_t = jnp.power(jnp.float32(temperature),
                      2.0 * jnp.floor(kidx / 2.0) / jnp.float32(f))
    inv = (1.0 / dim_t).astype(jnp.float32)                          # (F,)
    phase = jnp.where((jnp.arange(f) % 2) == 1,
                      jnp.float32(pi / 2.0), jnp.float32(0.0))       # (F,)
    if feat_pad:
        inv = jnp.pad(inv, (0, feat_pad))
        phase = jnp.pad(phase, (0, feat_pad))

    col = jnp.arange(fw)
    feat = col % fpad
    grp = col // fpad
    band = jnp.where(grp[None, :] == jnp.arange(g)[:, None],
                     inv[feat][None, :], 0.0).astype(jnp.float32)    # (g, FW)
    phase_t = phase[feat].reshape(1, fw).astype(jnp.float32)         # (1, FW)

    # ---- row packing: pad only to a multiple of g (at most g-1 scalars) ----
    xf = x.astype(jnp.float32).reshape(-1)
    n_g = _round_up(n, g)
    if n_g != n:
        xf = jnp.pad(xf, (0, n_g - n))
    n_rows = n_g // g
    x2d = xf.reshape(n_rows, g)

    # ---- tile sizing / VMEM budget ----
    out_itemsize = jnp.dtype(out_dtype).itemsize
    # Per row, double-buffered: input block lane-pads (tr, g) -> (tr, 128) f32,
    # so it costs as much VMEM as a 128-lane f32 output row.
    bytes_per_row = 2 * 128 * 4 + 2 * fw * out_itemsize
    vmem_budget = 20 * 1024 * 1024
    tr_cap = max(16, min(8192, (vmem_budget // bytes_per_row) // 16 * 16))
    # Keep >= 2 (target 4) grid steps so v7x's 2 TensorCores both get work and
    # each core still pipelines; tr stays a multiple of 16 (bf16-tile safe).
    target_steps = 4
    tr = max(16, min(tr_cap, _round_up(_cdiv(n_rows, target_steps), 16)))
    grid = _cdiv(n_rows, tr)     # partial boundary block handled by Pallas

    cost = pl.CostEstimate(
        flops=int(2 * n_rows * fw * (g + 1)),
        transcendentals=int(n_rows * fw),
        bytes_accessed=int(n_rows * g * 4
                           + n_rows * fw * out_itemsize
                           + (g + 1) * fw * 4),
    )

    out = pl.pallas_call(
        functools.partial(_sine_embed_kernel, groups=g),
        out_shape=jax.ShapeDtypeStruct((n_rows, fw), out_dtype),
        grid_spec=pl.GridSpec(
            grid=(grid,),
            in_specs=[
                pl.BlockSpec((tr, g), lambda i: (i, 0)),
                pl.BlockSpec((g, fw), lambda i: (0, 0)),   # resident constant
                pl.BlockSpec((1, fw), lambda i: (0, 0)),   # resident constant
            ],
            out_specs=pl.BlockSpec((tr, fw), lambda i: (i, 0)),
        ),
        compiler_params=pltpu.CompilerParams(
            dimension_semantics=("parallel",),
            vmem_limit_bytes=32 * 1024 * 1024,
        ),
        cost_estimate=cost,
    )(x2d, band, phase_t)

    # Undo lane-dense packing. (n_rows, g*F) row-major == (n_rows*g, F)
    # row-major, so the reshape is free.  The slice below only triggers when
    # n is not a multiple of g (removes at most g-1 trailing rows).
    if feat_pad:
        out = out[:, :f]
    out = out.reshape(n_rows * g, f)
    if n_g != n:
        out = out[:n]
    return out.reshape(*lead_shape, f)


def _reference(x, num_pos_feats=64, temperature=10000.0):
    # Pure-JAX reference mirroring the PyTorch forward exactly.
    idx = jnp.arange(num_pos_feats, dtype=jnp.float32)
    dim_t = temperature ** (2.0 * jnp.floor(idx / 2.0) / num_pos_feats)
    pos_x = x.astype(jnp.float32)[..., None] / dim_t          # (..., F)
    s = jnp.sin(pos_x[..., 0::2])
    c = jnp.cos(pos_x[..., 1::2])
    return jnp.stack((s, c), axis=-1).reshape(*x.shape, num_pos_feats)


if __name__ == "__main__":
    key = jax.random.PRNGKey(0)
    B, H, W = 2, 16, 16
    num_pos_feats = 64   # module default; F=64 -> g=2 scalars per 128-lane row

    x = jax.random.uniform(key, (B, H, W), dtype=jnp.float32) * 100.0

    out = scalar_embedding_sine(x, num_pos_feats=num_pos_feats)
    out = jax.block_until_ready(out)

    ref = _reference(x, num_pos_feats=num_pos_feats)
    assert out.shape == (B, H, W, num_pos_feats), out.shape
    err = float(jnp.max(jnp.abs(out - ref)))
    assert err < 2e-5, err
    print("KERNEL_OK")
</pallas_src>

<mosaic_0001>
module attributes {stable_mosaic.version = 11 : i64} {
  func.func @_sine_embed_kernel(%arg0: i32, %arg1: memref<64x2xf32, #tpu.memory_space<vmem>>, %arg2: memref<2x128xf32, #tpu.memory_space<vmem>>, %arg3: memref<1x128xf32, #tpu.memory_space<vmem>>, %arg4: memref<64x128xf32, #tpu.memory_space<vmem>>) attributes {dimension_semantics = [#tpu.dimension_semantics<parallel>], iteration_bounds = array<i64: 4>, scalar_prefetch = 0 : i64, scratch_operands = 0 : i64, tpu.core_type = #tpu.core_type<tc>, window_params = [{transform_indices = @transform_0, window_bounds = array<i64: 64, 2>}, {pipeline_mode = #tpu.pipeline_mode<synchronous>, transform_indices = @transform_1, window_bounds = array<i64: 2, 128>}, {pipeline_mode = #tpu.pipeline_mode<synchronous>, transform_indices = @transform_2, window_bounds = array<i64: 1, 128>}, {transform_indices = @transform_3, window_bounds = array<i64: 64, 128>}]} {
    %c0 = arith.constant 0 : index
    %c0_0 = arith.constant 0 : index
    %0 = vector.load %arg1[%c0, %c0_0] : memref<64x2xf32, #tpu.memory_space<vmem>>, vector<64x2xf32>
    %1 = vector.extract_strided_slice %0 {offsets = [0, 0], sizes = [64, 1], strides = [1, 1]} : vector<64x2xf32> to vector<64x1xf32>
    %c0_1 = arith.constant 0 : index
    %c0_2 = arith.constant 0 : index
    %2 = vector.load %arg2[%c0_1, %c0_2] : memref<2x128xf32, #tpu.memory_space<vmem>>, vector<1x128xf32>
    %3 = vector.broadcast %1 : vector<64x1xf32> to vector<64x128xf32>
    %4 = vector.broadcast %2 : vector<1x128xf32> to vector<64x128xf32>
    %5 = arith.mulf %3, %4 : vector<64x128xf32>
    %6 = vector.extract_strided_slice %0 {offsets = [0, 1], sizes = [64, 1], strides = [1, 1]} : vector<64x2xf32> to vector<64x1xf32>
    %c1 = arith.constant 1 : index
    %c0_3 = arith.constant 0 : index
    %7 = vector.load %arg2[%c1, %c0_3] : memref<2x128xf32, #tpu.memory_space<vmem>>, vector<1x128xf32>
    %8 = vector.broadcast %6 : vector<64x1xf32> to vector<64x128xf32>
    %9 = vector.broadcast %7 : vector<1x128xf32> to vector<64x128xf32>
    %10 = arith.mulf %8, %9 : vector<64x128xf32>
    %11 = arith.addf %5, %10 : vector<64x128xf32>
    %c0_4 = arith.constant 0 : index
    %c0_5 = arith.constant 0 : index
    %12 = vector.load %arg3[%c0_4, %c0_5] : memref<1x128xf32, #tpu.memory_space<vmem>>, vector<1x128xf32>
    %13 = vector.broadcast %12 : vector<1x128xf32> to vector<64x128xf32>
    %14 = arith.addf %11, %13 : vector<64x128xf32>
    %15 = math.sin %14 : vector<64x128xf32>
    %c0_6 = arith.constant 0 : index
    %c0_7 = arith.constant 0 : index
    %16 = vector.load %arg4[%c0_6, %c0_7] : memref<64x128xf32, #tpu.memory_space<vmem>>, vector<64x128xf32>
    tpu.vector_store %arg4[%c0_6, %c0_7], %15 {strides = array<i32>} : memref<64x128xf32, #tpu.memory_space<vmem>>, vector<64x128xf32>,
    return
  }
  func.func @transform_0(%arg0: i32) -> (i32, i32) {
    %c0_i32 = arith.constant 0 : i32
    %c0_i32_0 = arith.constant 0 : i32
    return %arg0, %c0_i32 : i32, i32
  }
  func.func @transform_1(%arg0: i32) -> (i32, i32) {
    %c0_i32 = arith.constant 0 : i32
    %c0_i32_0 = arith.constant 0 : i32
    %c0_i32_1 = arith.constant 0 : i32
    return %c0_i32, %c0_i32_0 : i32, i32
  }
  func.func @transform_2(%arg0: i32) -> (i32, i32) {
    %c0_i32 = arith.constant 0 : i32
    %c0_i32_0 = arith.constant 0 : i32
    %c0_i32_1 = arith.constant 0 : i32
    return %c0_i32, %c0_i32_0 : i32, i32
  }
  func.func @transform_3(%arg0: i32) -> (i32, i32) {
    %c0_i32 = arith.constant 0 : i32
    %c0_i32_0 = arith.constant 0 : i32
    return %arg0, %c0_i32 : i32, i32
  }
}

</mosaic_0001>

<llo_original>
// kernel: tpu_custom_call.1
$region0: #{tpu_custom_call.1}
  #allocation0 [shape = 'u32[]', space=smem, size = 0x4, offset = 0x4, fixed_abs, tag = 'smem constant byte address 0x4 - core index']
  #allocation1 [shape = 'u32[144,128]{1,0:T(1,128)}', space=vmem, size = 0x12000, scoped, tag = 'internal scratch']
  %s0 = inlined_call_operand.vmem [shape: f32[256,2], index: 0, kind: input, shape index: {}]
  %s1 = inlined_call_operand.vmem [shape: f32[2,128], index: 1, kind: input, shape index: {}]
  %s2 = inlined_call_operand.vmem [shape: f32[1,128], index: 2, kind: input, shape index: {}]
  %s3 = inlined_call_operand.hbm [shape: f32[256,128], index: 3, kind: output, shape index: {}]
  %s4 = sld [smem:[#allocation0]]
  $region45: #{tpu_custom_call.1} parent=0
    _
  %s6 = ssub.s32 1, %s4
  %s7 = scalar_select 0, %s6, %s4
  $region1: #{tpu_custom_call.1} parent=0
    #allocation2 [shape = 'u8[65536]{0}', space=vmem, size = 0x10000, scoped, tag = 'output window, operand 0']
    #allocation3 [shape = 's32[2]{0}', space=sflag, size = 0x8, scoped, tag = 'scoped memory for tpu_custom_call.1']
    %8 = vsyncpa [#allocation3], 0
    %s9 = scalar_lea.sflag [#allocation3], 1
    %10 = vsyncpa %s9, 0
    loop: start=0, step=1, limit=6
    $region2: #{tpu_custom_call.1} parent=1 // loop_pre_header
      _
    $region3: #{tpu_custom_call.1} parent=1 // loop_header
      %s12 = sphi 0, %s16
      %p13 = scmp.ge.s32.totalorder %s12, 6
      %s22 = sphi 0, %s24
      %s25 = sphi 0, %s22
      %s26 = sphi 0, %s25
      %s42 = sphi 0, %s26
      %s46 = sphi 0, %s46
      %s48 = sphi 0, %s46
      %s49 = sphi 0, %s48
      %s63 = sphi 0, %s49
      %s67 = sphi 0, %s67
      %s69 = sphi 0, %s67
      %s70 = sphi 0, %s69
      %s84 = sphi 0, %s70
      %s90 = sphi 0, %s92
      %s93 = sphi 0, %s90
      %s94 = sphi 0, %s93
      %s110 = sphi 0, %s94
    $region4: #{tpu_custom_call.1} parent=1 // loop_header_branch
      %15 = sbr.rel (%p13) target = $region8
    $region5: #{tpu_custom_call.1} parent=1 // loop_body
      %s17 = ssub.s32 %s12, 1
      %s18 = ssub.s32 %s12, 2
      %s19 = sadd.s32 %s12, 1
      %s20 = ssub.s32 %s12, %s19
      %p21 = scmp.eq.s32.totalorder %s20, 0
      %s23 = sadd.s32 %s22, 1
      %s24 = scalar_select %p21, %s22, %s23
      %p27 = pneg %p21
      %p28 = scmp.eq.s32.totalorder %s12, 3
      %p29 = por %p27, %p28
      %p30 = scmp.ne.s32.totalorder %s22, %s25
      %p31 = scmp.eq.s32.totalorder %s12, 0
      %p32 = por %p30, %p31
      %p33 = scmp.ne.s32.totalorder %s22, %s25
      %p34 = scmp.eq.s32.totalorder %s17, 3
      %p35 = por %p33, %p34
      %p36 = scmp.ne.s32.totalorder %s25, %s26
      %p37 = scmp.eq.s32.totalorder %s17, 0
      %p38 = por %p36, %p37
      %p39 = scmp.ne.s32.totalorder %s25, %s26
      %p40 = scmp.eq.s32.totalorder %s18, 3
      %p41 = por %p39, %p40
      %p43 = scmp.ne.s32.totalorder %s26, %s42
      %p44 = scmp.eq.s32.totalorder %s18, 0
      %p45 = por %p43, %p44
      %s47 = sadd.s32 %s46, 1
      %p50 = scmp.eq.s32.totalorder %s12, 3
      %p51 = scmp.ne.s32.totalorder %s46, %s48
      %p52 = scmp.eq.s32.totalorder %s12, 0
      %p53 = por %p51, %p52
      %p54 = scmp.ne.s32.totalorder %s46, %s48
      %p55 = scmp.eq.s32.totalorder %s17, 3
      %p56 = por %p54, %p55
      %p57 = scmp.ne.s32.totalorder %s48, %s49
      %p58 = scmp.eq.s32.totalorder %s17, 0
      %p59 = por %p57, %p58
      %p60 = scmp.ne.s32.totalorder %s48, %s49
      %p61 = scmp.eq.s32.totalorder %s18, 3
      %p62 = por %p60, %p61
      %p64 = scmp.ne.s32.totalorder %s49, %s63
      %p65 = scmp.eq.s32.totalorder %s18, 0
      %p66 = por %p64, %p65
      %s68 = sadd.s32 %s67, 1
      %p71 = scmp.eq.s32.totalorder %s12, 3
      %p72 = scmp.ne.s32.totalorder %s67, %s69
      %p73 = scmp.eq.s32.totalorder %s12, 0
      %p74 = por %p72, %p73
      %p75 = scmp.ne.s32.totalorder %s67, %s69
      %p76 = scmp.eq.s32.totalorder %s17, 3
      %p77 = por %p75, %p76
      %p78 = scmp.ne.s32.totalorder %s69, %s70
      %p79 = scmp.eq.s32.totalorder %s17, 0
      %p80 = por %p78, %p79
      %p81 = scmp.ne.s32.totalorder %s69, %s70
      %p82 = scmp.eq.s32.totalorder %s18, 3
      %p83 = por %p81, %p82
      %p85 = scmp.ne.s32.totalorder %s70, %s84
      %p86 = scmp.eq.s32.totalorder %s18, 0
      %p87 = por %p85, %p86
      %s88 = ssub.s32 %s12, %s19
      %p89 = scmp.eq.s32.totalorder %s88, 0
      %s91 = sadd.s32 %s90, 1
      %s92 = scalar_select %p89, %s90, %s91
      %p95 = pneg %p89
      %p96 = scmp.eq.s32.totalorder %s12, 3
      %p97 = por %p95, %p96
      %p98 = scmp.ne.s32.totalorder %s90, %s93
      %p99 = scmp.eq.s32.totalorder %s12, 0
      %p100 = por %p98, %p99
      %p101 = scmp.ne.s32.totalorder %s90, %s93
      %p102 = scmp.eq.s32.totalorder %s17, 3
      %p103 = por %p101, %p102
      %p104 = scmp.ne.s32.totalorder %s93, %s94
      %p105 = scmp.eq.s32.totalorder %s17, 0
      %p106 = por %p104, %p105
      %p107 = scmp.ne.s32.totalorder %s93, %s94
      %p108 = scmp.eq.s32.totalorder %s18, 3
      %p109 = por %p107, %p108
      %p111 = scmp.ne.s32.totalorder %s94, %s110
      %p112 = scmp.eq.s32.totalorder %s18, 0
      %p113 = por %p111, %p112
      %p114 = scmp.le.s32.totalorder 1, %s12
      %p115 = scmp.lt.s32.totalorder %s12, 5
      %p116 = pnand %p114, %p115
      %p117 = pneg %p116
      // Predicated region
      $region9: #{tpu_custom_call.1} parent=5 // pred_check
        _
      $region10: #{tpu_custom_call.1} parent=5 // pred_check_branch
        %119 = sbr.rel (%p116) target = $region12
      $region11: #{tpu_custom_call.1} parent=5 // pred_region
        %s120 = ssub.s32 %s12, 1
        // Predicated region
        $region13: #{tpu_custom_call.1} parent=11 // pred_check
          %p121 = pneg %p59
        $region14: #{tpu_custom_call.1} parent=11 // pred_check_branch
          %123 = sbr.rel (%p121) target = $region16
        $region15: #{tpu_custom_call.1} parent=11 // pred_region
          _
        $region16: #{tpu_custom_call.1} parent=11 // pred_fallthru
          _
        // Predicated region
        $region17: #{tpu_custom_call.1} parent=11 // pred_check
          %p124 = pneg %p80
        $region18: #{tpu_custom_call.1} parent=11 // pred_check_branch
          %126 = sbr.rel (%p124) target = $region20
        $region19: #{tpu_custom_call.1} parent=11 // pred_region
          _
        $region20: #{tpu_custom_call.1} parent=11 // pred_fallthru
          _
      $region12: #{tpu_custom_call.1} parent=5 // pred_fallthru
        _
      %p127 = scmp.lt.s32.totalorder %s12, 4
      // Predicated region
      $region21: #{tpu_custom_call.1} parent=5 // pred_check
        %p128 = pneg %p127
      $region22: #{tpu_custom_call.1} parent=5 // pred_check_branch
        %130 = sbr.rel (%p128) target = $region24
      $region23: #{tpu_custom_call.1} parent=5 // pred_region
        // Predicated region
        $region25: #{tpu_custom_call.1} parent=23 // pred_check
          %p131 = pneg %p32
        $region26: #{tpu_custom_call.1} parent=23 // pred_check_branch
          %133 = sbr.rel (%p131) target = $region28
        $region27: #{tpu_custom_call.1} parent=23 // pred_region
          %s134 = smul.u32 8, %s12
          %p135 = scmp.lt.s32.totalorder %s134, 31
          %s136 = scalar_select %p135, %s134, 31
          %s137 = smul.addr %s136, 8
          %s138 = scalar_lea.vmem %s0, %s137
          %s139 = smul.u32 8, %s12
        $region28: #{tpu_custom_call.1} parent=23 // pred_fallthru
          _
      $region24: #{tpu_custom_call.1} parent=5 // pred_fallthru
        _
      %p140 = scmp.le.s32.totalorder 1, %s12
      %p141 = scmp.lt.s32.totalorder %s12, 5
      %p142 = pnand %p140, %p141
      %p143 = pneg %p142
      // Predicated region
      $region29: #{tpu_custom_call.1} parent=5 // pred_check
        _
      $region30: #{tpu_custom_call.1} parent=5 // pred_check_branch
        %145 = sbr.rel (%p142) target = $region32
      $region31: #{tpu_custom_call.1} parent=5 // pred_region
        %s146 = ssub.s32 %s12, 1
        %s147 = smul.u32 8, %s17
        %p148 = scmp.lt.s32.totalorder %s147, 31
        %s149 = scalar_select %p148, %s147, 31
        %s150 = smul.addr %s149, 8
        %s151 = scalar_lea.vmem %s0, %s150
        %p152 = pneg %p38
        %p153 = pneg %p35
        %p154 = pneg %p59
        %p155 = pneg %p56
        %p156 = pneg %p80
        %p157 = pneg %p77
        %p158 = pneg %p106
        %p159 = pneg %p103
        %s160 = sand.u32 %s93, 1
        %s161 = scalar_lea.sflag [#allocation3], %s160
        %s162 = sand.u32 %s93, 1
        %s163 = smul.addr %s162, 64
        %s164 = scalar_lea.vmem [#allocation2], %s163
        %s165 = smul.u32 8, %s17
        %p166 = scmp.lt.s32.totalorder %s165, 31
        %s167 = scalar_select %p166, %s165, 31
        %s168 = smul.addr %s167, 8
        %s169 = scalar_lea.vmem %s0, %s168
        %s170 = smul.u32 8, %s17
        %s171 = smul.u32 8, %s17
        %v172 = vld [vmem:[%s169] sm:$0xff]
        %v173 = vld [vmem:[%s169 + $0x8] sm:$0xff]
        %v174 = vld [vmem:[%s169 + $0x10] sm:$0xff]
        %v175 = vld [vmem:[%s169 + $0x18] sm:$0xff]
        %v176 = vld [vmem:[%s169 + $0x20] sm:$0xff]
        %v177 = vld [vmem:[%s169 + $0x28] sm:$0xff]
        %v178 = vld [vmem:[%s169 + $0x30] sm:$0xff]
        %v179 = vld [vmem:[%s169 + $0x38] sm:$0xff]
        %v180 = vld [vmem:[%s1] sm:$0x1]
        %182 = vset.pattern.permute.xlu0 0
        %183 = vperm.xlu0 %182, %v172
        %v184 = vpop.permute.xlu0 %183
        %187 = vset.pattern.permute.xlu0 0
        %188 = vperm.xlu0 %187, %v173
        %v189 = vpop.permute.xlu0 %188
        %192 = vset.pattern.permute.xlu0 0
        %193 = vperm.xlu0 %192, %v174
        %v194 = vpop.permute.xlu0 %193
        %197 = vset.pattern.permute.xlu0 0
        %198 = vperm.xlu0 %197, %v175
        %v199 = vpop.permute.xlu0 %198
        %202 = vset.pattern.permute.xlu0 0
        %203 = vperm.xlu0 %202, %v176
        %v204 = vpop.permute.xlu0 %203
        %207 = vset.pattern.permute.xlu0 0
        %208 = vperm.xlu0 %207, %v177
        %v209 = vpop.permute.xlu0 %208
        %212 = vset.pattern.permute.xlu0 0
        %213 = vperm.xlu0 %212, %v178
        %v214 = vpop.permute.xlu0 %213
        %217 = vset.pattern.permute.xlu0 0
        %218 = vperm.xlu0 %217, %v179
        %v219 = vpop.permute.xlu0 %218
        %v221 = vlaneseq
        %v222 = vshrl.u32 %v221, 7
        %v223 = vsub.s32 0, %v222
        %v224 = vrot.slane %v180, %v223
        %v225 = vmul.f32 %v184, %v224
        %v226 = vmul.f32 %v189, %v224
        %v227 = vmul.f32 %v194, %v224
        %v228 = vmul.f32 %v199, %v224
        %v229 = vmul.f32 %v204, %v224
        %v230 = vmul.f32 %v209, %v224
        %v231 = vmul.f32 %v214, %v224
        %v232 = vmul.f32 %v219, %v224
        %v233 = vld [vmem:[%s1 + $0x1] sm:$0x1]
        %234 = vset.pattern.permute.xlu0 1
        %235 = vperm.xlu0 %234, %v172
        %v236 = vpop.permute.xlu0 %235
        %238 = vset.pattern.permute.xlu0 1
        %239 = vperm.xlu0 %238, %v173
        %v240 = vpop.permute.xlu0 %239
        %242 = vset.pattern.permute.xlu0 1
        %243 = vperm.xlu0 %242, %v174
        %v244 = vpop.permute.xlu0 %243
        %246 = vset.pattern.permute.xlu0 1
        %247 = vperm.xlu0 %246, %v175
        %v248 = vpop.permute.xlu0 %247
        %250 = vset.pattern.permute.xlu0 1
        %251 = vperm.xlu0 %250, %v176
        %v252 = vpop.permute.xlu0 %251
        %254 = vset.pattern.permute.xlu0 1
        %255 = vperm.xlu0 %254, %v177
        %v256 = vpop.permute.xlu0 %255
        %258 = vset.pattern.permute.xlu0 1
        %259 = vperm.xlu0 %258, %v178
        %v260 = vpop.permute.xlu0 %259
        %262 = vset.pattern.permute.xlu0 1
        %263 = vperm.xlu0 %262, %v179
        %v264 = vpop.permute.xlu0 %263
        %v266 = vlaneseq
        %v267 = vshrl.u32 %v266, 7
        %v268 = vsub.s32 0, %v267
        %v269 = vrot.slane %v233, %v268
        %v270 = vmul.f32 %v236, %v269
        %v271 = vmul.f32 %v240, %v269
        %v272 = vmul.f32 %v244, %v269
        %v273 = vmul.f32 %v248, %v269
        %v274 = vmul.f32 %v252, %v269
        %v275 = vmul.f32 %v256, %v269
        %v276 = vmul.f32 %v260, %v269
        %v277 = vmul.f32 %v264, %v269
        %v278 = vadd.f32 %v225, %v270
        %v279 = vadd.f32 %v226, %v271
        %v280 = vadd.f32 %v227, %v272
        %v281 = vadd.f32 %v228, %v273
        %v282 = vadd.f32 %v229, %v274
        %v283 = vadd.f32 %v230, %v275
        %v284 = vadd.f32 %v231, %v276
        %v285 = vadd.f32 %v232, %v277
        %v286 = vld [vmem:[%s2] sm:$0x1]
        %v288 = vlaneseq
        %v289 = vshrl.u32 %v288, 7
        %v290 = vsub.s32 0, %v289
        %v291 = vrot.slane %v286, %v290
        %v293 = vadd.f32 %v278, %v291
        %v294 = vadd.f32 %v279, %v291
        %v295 = vadd.f32 %v280, %v291
        %v296 = vadd.f32 %v281, %v291
        %v297 = vadd.f32 %v282, %v291
        %v298 = vadd.f32 %v283, %v291
        %v299 = vadd.f32 %v284, %v291
        %v300 = vadd.f32 %v285, %v291
        %v301 = vand.u32 2147483647, %v293
        %vm302 = vcmp.le.f32.partialorder %v301, 0.7853982
        %vm303 = vcmp.lt.s32.totalorder %v293, 0
        %v304 = vand.u32 %v293, 2139095040
        %v305 = vshrl.u32 %v304, 23
        %v306 = vsub.s32 %v305, 127
        %v307 = vand.u32 2147483647, %v293
        %v308 = vand.u32 %v307, 8388607
        %v309 = vor.u32 %v308, 8388608
        %v310 = vsub.s32 0, %v309
        %v311 = vadd.s32 %v306, 1
        %vm312 = vcmp.gt.s32.totalorder %v311, 0
        %v313 = vsel %vm312, %v311, 0
        %v314 = vshrl.u32 %v313, 5
        %v315 = vand.u32 %v313, 31
        %v316 = vsub.s32 32, %v315
        %v317 = vshrl.u32 683565275, %v316
        %v318 = vshll.u32 683565275, %v315
        %v319 = vshrl.u32 2475754826, %v316
        %v320 = vor.u32 %v318, %v319
        %v321 = vshll.u32 2475754826, %v315
        %v322 = vshrl.u32 2131351028, %v316
        %v323 = vor.u32 %v321, %v322
        %v324 = vshll.u32 2131351028, %v315
        %v325 = vshrl.u32 2102212464, %v316
        %v326 = vor.u32 %v324, %v325
        %v327 = vshll.u32 2102212464, %v315
        %v328 = vshrl.u32 920167782, %v316
        %v329 = vor.u32 %v327, %v328
        %v330 = vshll.u32 920167782, %v315
        %v331 = vshrl.u32 1326507024, %v316
        %v332 = vor.u32 %v330, %v331
        %vm333 = vcmp.lt.s32.totalorder %v314, 1
        %vm334 = vcmp.lt.s32.totalorder %v314, 2
        %vm335 = vcmp.lt.s32.totalorder %v314, 3
        %vm336 = vcmp.lt.s32.totalorder %v314, 4
        %v337 = vsel %vm333, %v317, %v320
        %v338 = vsel %vm336, %v326, 2102212464
        %v339 = vsel %vm335, %v323, %v338
        %v340 = vsel %vm334, %v337, %v339
        %v341 = vsel %vm333, %v320, %v323
        %v342 = vsel %vm336, %v329, 920167782
        %v343 = vsel %vm335, %v326, %v342
        %v344 = vsel %vm334, %v341, %v343
        %v345 = vsel %vm333, %v323, %v326
        %v346 = vsel %vm336, %v332, 1326507024
        %v347 = vsel %vm335, %v329, %v346
        %v348 = vsel %vm334, %v345, %v347
        %v349 = vshll.u32 %v309, 8
        %v350 = vmul.u32.u64.compose %v349, %v348
        %v351 = vextract.low.u32 %v350
        %v352 = vextract.high.u32 %v350
        %v353 = vmul.u32.u64.compose %v349, %v344
        %v354 = vextract.low.u32 %v353
        %v355 = vextract.high.u32 %v353
        %v356 = vmul.u32 %v349, %v340
        %v357 = vadd.s32 %v352, %v354
        %vm358 = vc.u32 %v352, %v354
        %v359 = vadd.s32 %v355, 1
        %v360 = vsel %vm358, %v359, %v355
        %v361 = vadd.s32 %v356, %v360
        %v362 = vadd.s32 %v361, 536870912
        %v363 = vshrl.u32 %v362, 30
        %v364 = vshll.u32 %v363, 30
        %v365 = vsub.s32 %v361, %v364
        %vm366 = vcmp.lt.s32.totalorder %v365, 0
        %v367 = vsub.s32 0, %v365
        %v368 = vsel %vm366, %v367, %v365
        %v369 = vclz %v368
        %v370 = vsub.s32 %v369, 2
        %vm371 = vcmp.gt.s32.totalorder 0, %v370
        %v372 = vsel %vm371, 0, %v370
        %v373 = vsub.s32 32, %v372
        %v374 = vshll.u32 %v365, %v372
        %v375 = vshrl.u32 %v357, %v373
        %v376 = vor.u32 %v374, %v375
        %v377 = vsub.s32 4294967266, %v372
        %v378 = vadd.s32 %v377, 127
        %v379 = vshll.u32 %v378, 23
        %v380 = vor.u32 4788187, %v379
        %v381 = vand.u32 2147483647, %v380
        %v383 = vcvt.s32.f32 %v376
        %v384 = vmul.f32 %v383, %v381
        %v385 = vxor.u32 %v384, 2147483648
        %v386 = vsel %vm303, %v385, %v384
        %v387 = vsub.s32 4, %v363
        %v388 = vsel %vm303, %v387, %v363
        %v389 = vsel %vm302, %v293, %v386
        %v390 = vsel %vm302, 0, %v388
        %v391 = vcosq.f32.pop %v389
        %v392 = vsinq.f32.pop %v389
        %vm393 = vweird.f32 %v293
        %v394 = vadd.s32 %v390, 3
        %v395 = vand.u32 %v394, 3
        %vm396 = vcmp.lt.s32.totalorder %v395, 2
        %vm397 = vcmp.eq.s32.totalorder %v395, 0
        %v398 = vxor.u32 %v392, 2147483648
        %v399 = vsel %vm397, %v391, %v398
        %vm400 = vcmp.eq.s32.totalorder %v395, 2
        %v401 = vxor.u32 %v391, 2147483648
        %v402 = vsel %vm400, %v401, %v392
        %v403 = vsel %vm396, %v399, %v402
        %v404 = vsel %vm393, nan, %v403
        %v405 = vand.u32 2147483647, %v294
        %vm406 = vcmp.le.f32.partialorder %v405, 0.7853982
        %vm407 = vcmp.lt.s32.totalorder %v294, 0
        %v408 = vand.u32 %v294, 2139095040
        %v409 = vshrl.u32 %v408, 23
        %v410 = vsub.s32 %v409, 127
        %v411 = vand.u32 2147483647, %v294
        %v412 = vand.u32 %v411, 8388607
        %v413 = vor.u32 %v412, 8388608
        %v414 = vsub.s32 0, %v413
        %v415 = vadd.s32 %v410, 1
        %vm416 = vcmp.gt.s32.totalorder %v415, 0
        %v417 = vsel %vm416, %v415, 0
        %v418 = vshrl.u32 %v417, 5
        %v419 = vand.u32 %v417, 31
        %v420 = vsub.s32 32, %v419
        %v421 = vshrl.u32 683565275, %v420
        %v422 = vshll.u32 683565275, %v419
        %v423 = vshrl.u32 2475754826, %v420
        %v424 = vor.u32 %v422, %v423
        %v425 = vshll.u32 2475754826, %v419
        %v426 = vshrl.u32 2131351028, %v420
        %v427 = vor.u32 %v425, %v426
        %v428 = vshll.u32 2131351028, %v419
        %v429 = vshrl.u32 2102212464, %v420
        %v430 = vor.u32 %v428, %v429
        %v431 = vshll.u32 2102212464, %v419
        %v432 = vshrl.u32 920167782, %v420
        %v433 = vor.u32 %v431, %v432
        %v434 = vshll.u32 920167782, %v419
        %v435 = vshrl.u32 1326507024, %v420
        %v436 = vor.u32 %v434, %v435
        %vm437 = vcmp.lt.s32.totalorder %v418, 1
        %vm438 = vcmp.lt.s32.totalorder %v418, 2
        %vm439 = vcmp.lt.s32.totalorder %v418, 3
        %vm440 = vcmp.lt.s32.totalorder %v418, 4
        %v441 = vsel %vm437, %v421, %v424
        %v442 = vsel %vm440, %v430, 2102212464
        %v443 = vsel %vm439, %v427, %v442
        %v444 = vsel %vm438, %v441, %v443
        %v445 = vsel %vm437, %v424, %v427
        %v446 = vsel %vm440, %v433, 920167782
        %v447 = vsel %vm439, %v430, %v446
        %v448 = vsel %vm438, %v445, %v447
        %v449 = vsel %vm437, %v427, %v430
        %v450 = vsel %vm440, %v436, 1326507024
        %v451 = vsel %vm439, %v433, %v450
        %v452 = vsel %vm438, %v449, %v451
        %v453 = vshll.u32 %v413, 8
        %v454 = vmul.u32.u64.compose %v453, %v452
        %v455 = vextract.low.u32 %v454
        %v456 = vextract.high.u32 %v454
        %v457 = vmul.u32.u64.compose %v453, %v448
        %v458 = vextract.low.u32 %v457
        %v459 = vextract.high.u32 %v457
        %v460 = vmul.u32 %v453, %v444
        %v461 = vadd.s32 %v456, %v458
        %vm462 = vc.u32 %v456, %v458
        %v463 = vadd.s32 %v459, 1
        %v464 = vsel %vm462, %v463, %v459
        %v465 = vadd.s32 %v460, %v464
        %v466 = vadd.s32 %v465, 536870912
        %v467 = vshrl.u32 %v466, 30
        %v468 = vshll.u32 %v467, 30
        %v469 = vsub.s32 %v465, %v468
        %vm470 = vcmp.lt.s32.totalorder %v469, 0
        %v471 = vsub.s32 0, %v469
        %v472 = vsel %vm470, %v471, %v469
        %v473 = vclz %v472
        %v474 = vsub.s32 %v473, 2
        %vm475 = vcmp.gt.s32.totalorder 0, %v474
        %v476 = vsel %vm475, 0, %v474
        %v477 = vsub.s32 32, %v476
        %v478 = vshll.u32 %v469, %v476
        %v479 = vshrl.u32 %v461, %v477
        %v480 = vor.u32 %v478, %v479
        %v481 = vsub.s32 4294967266, %v476
        %v482 = vadd.s32 %v481, 127
        %v483 = vshll.u32 %v482, 23
        %v484 = vor.u32 4788187, %v483
        %v485 = vand.u32 2147483647, %v484
        %v487 = vcvt.s32.f32 %v480
        %v488 = vmul.f32 %v487, %v485
        %v489 = vxor.u32 %v488, 2147483648
        %v490 = vsel %vm407, %v489, %v488
        %v491 = vsub.s32 4, %v467
        %v492 = vsel %vm407, %v491, %v467
        %v493 = vsel %vm406, %v294, %v490
        %v494 = vsel %vm406, 0, %v492
        %v495 = vcosq.f32.pop %v493
        %v496 = vsinq.f32.pop %v493
        %vm497 = vweird.f32 %v294
        %v498 = vadd.s32 %v494, 3
        %v499 = vand.u32 %v498, 3
        %vm500 = vcmp.lt.s32.totalorder %v499, 2
        %vm501 = vcmp.eq.s32.totalorder %v499, 0
        %v502 = vxor.u32 %v496, 2147483648
        %v503 = vsel %vm501, %v495, %v502
        %vm504 = vcmp.eq.s32.totalorder %v499, 2
        %v505 = vxor.u32 %v495, 2147483648
        %v506 = vsel %vm504, %v505, %v496
        %v507 = vsel %vm500, %v503, %v506
        %v508 = vsel %vm497, nan, %v507
        %v509 = vand.u32 2147483647, %v295
        %vm510 = vcmp.le.f32.partialorder %v509, 0.7853982
        %vm511 = vcmp.lt.s32.totalorder %v295, 0
        %v512 = vand.u32 %v295, 2139095040
        %v513 = vshrl.u32 %v512, 23
        %v514 = vsub.s32 %v513, 127
        %v515 = vand.u32 2147483647, %v295
        %v516 = vand.u32 %v515, 8388607
        %v517 = vor.u32 %v516, 8388608
        %v518 = vsub.s32 0, %v517
        %v519 = vadd.s32 %v514, 1
        %vm520 = vcmp.gt.s32.totalorder %v519, 0
        %v521 = vsel %vm520, %v519, 0
        %v522 = vshrl.u32 %v521, 5
        %v523 = vand.u32 %v521, 31
        %v524 = vsub.s32 32, %v523
        %v525 = vshrl.u32 683565275, %v524
        %v526 = vshll.u32 683565275, %v523
        %v527 = vshrl.u32 2475754826, %v524
        %v528 = vor.u32 %v526, %v527
        %v529 = vshll.u32 2475754826, %v523
        %v530 = vshrl.u32 2131351028, %v524
        %v531 = vor.u32 %v529, %v530
        %v532 = vshll.u32 2131351028, %v523
        %v533 = vshrl.u32 2102212464, %v524
        %v534 = vor.u32 %v532, %v533
        %v535 = vshll.u32 2102212464, %v523
        %v536 = vshrl.u32 920167782, %v524
        %v537 = vor.u32 %v535, %v536
        %v538 = vshll.u32 920167782, %v523
        %v539 = vshrl.u32 1326507024, %v524
        %v540 = vor.u32 %v538, %v539
        %vm541 = vcmp.lt.s32.totalorder %v522, 1
        %vm542 = vcmp.lt.s32.totalorder %v522, 2
        %vm543 = vcmp.lt.s32.totalorder %v522, 3
        %vm544 = vcmp.lt.s32.totalorder %v522, 4
        %v545 = vsel %vm541, %v525, %v528
        %v546 = vsel %vm544, %v534, 2102212464
        %v547 = vsel %vm543, %v531, %v546
        %v548 = vsel %vm542, %v545, %v547
        %v549 = vsel %vm541, %v528, %v531
        %v550 = vsel %vm544, %v537, 920167782
        %v551 = vsel %vm543, %v534, %v550
        %v552 = vsel %vm542, %v549, %v551
        %v553 = vsel %vm541, %v531, %v534
        %v554 = vsel %vm544, %v540, 1326507024
        %v555 = vsel %vm543, %v537, %v554
        %v556 = vsel %vm542, %v553, %v555
        %v557 = vshll.u32 %v517, 8
        %v558 = vmul.u32.u64.compose %v557, %v556
        %v559 = vextract.low.u32 %v558
        %v560 = vextract.high.u32 %v558
        %v561 = vmul.u32.u64.compose %v557, %v552
        %v562 = vextract.low.u32 %v561
        %v563 = vextract.high.u32 %v561
        %v564 = vmul.u32 %v557, %v548
        %v565 = vadd.s32 %v560, %v562
        %vm566 = vc.u32 %v560, %v562
        %v567 = vadd.s32 %v563, 1
        %v568 = vsel %vm566, %v567, %v563
        %v569 = vadd.s32 %v564, %v568
        %v570 = vadd.s32 %v569, 536870912
        %v571 = vshrl.u32 %v570, 30
        %v572 = vshll.u32 %v571, 30
        %v573 = vsub.s32 %v569, %v572
        %vm574 = vcmp.lt.s32.totalorder %v573, 0
        %v575 = vsub.s32 0, %v573
        %v576 = vsel %vm574, %v575, %v573
        %v577 = vclz %v576
        %v578 = vsub.s32 %v577, 2
        %vm579 = vcmp.gt.s32.totalorder 0, %v578
        %v580 = vsel %vm579, 0, %v578
        %v581 = vsub.s32 32, %v580
        %v582 = vshll.u32 %v573, %v580
        %v583 = vshrl.u32 %v565, %v581
        %v584 = vor.u32 %v582, %v583
        %v585 = vsub.s32 4294967266, %v580
        %v586 = vadd.s32 %v585, 127
        %v587 = vshll.u32 %v586, 23
        %v588 = vor.u32 4788187, %v587
        %v589 = vand.u32 2147483647, %v588
        %v591 = vcvt.s32.f32 %v584
        %v592 = vmul.f32 %v591, %v589
        %v593 = vxor.u32 %v592, 2147483648
        %v594 = vsel %vm511, %v593, %v592
        %v595 = vsub.s32 4, %v571
        %v596 = vsel %vm511, %v595, %v571
        %v597 = vsel %vm510, %v295, %v594
        %v598 = vsel %vm510, 0, %v596
        %v599 = vcosq.f32.pop %v597
        %v600 = vsinq.f32.pop %v597
        %vm601 = vweird.f32 %v295
        %v602 = vadd.s32 %v598, 3
        %v603 = vand.u32 %v602, 3
        %vm604 = vcmp.lt.s32.totalorder %v603, 2
        %vm605 = vcmp.eq.s32.totalorder %v603, 0
        %v606 = vxor.u32 %v600, 2147483648
        %v607 = vsel %vm605, %v599, %v606
        %vm608 = vcmp.eq.s32.totalorder %v603, 2
        %v609 = vxor.u32 %v599, 2147483648
        %v610 = vsel %vm608, %v609, %v600
        %v611 = vsel %vm604, %v607, %v610
        %v612 = vsel %vm601, nan, %v611
        %v613 = vand.u32 2147483647, %v296
        %vm614 = vcmp.le.f32.partialorder %v613, 0.7853982
        %vm615 = vcmp.lt.s32.totalorder %v296, 0
        %v616 = vand.u32 %v296, 2139095040
        %v617 = vshrl.u32 %v616, 23
        %v618 = vsub.s32 %v617, 127
        %v619 = vand.u32 2147483647, %v296
        %v620 = vand.u32 %v619, 8388607
        %v621 = vor.u32 %v620, 8388608
        %v622 = vsub.s32 0, %v621
        %v623 = vadd.s32 %v618, 1
        %vm624 = vcmp.gt.s32.totalorder %v623, 0
        %v625 = vsel %vm624, %v623, 0
        %v626 = vshrl.u32 %v625, 5
        %v627 = vand.u32 %v625, 31
        %v628 = vsub.s32 32, %v627
        %v629 = vshrl.u32 683565275, %v628
        %v630 = vshll.u32 683565275, %v627
        %v631 = vshrl.u32 2475754826, %v628
        %v632 = vor.u32 %v630, %v631
        %v633 = vshll.u32 2475754826, %v627
        %v634 = vshrl.u32 2131351028, %v628
        %v635 = vor.u32 %v633, %v634
        %v636 = vshll.u32 2131351028, %v627
        %v637 = vshrl.u32 2102212464, %v628
        %v638 = vor.u32 %v636, %v637
        %v639 = vshll.u32 2102212464, %v627
        %v640 = vshrl.u32 920167782, %v628
        %v641 = vor.u32 %v639, %v640
        %v642 = vshll.u32 920167782, %v627
        %v643 = vshrl.u32 1326507024, %v628
        %v644 = vor.u32 %v642, %v643
        %vm645 = vcmp.lt.s32.totalorder %v626, 1
        %vm646 = vcmp.lt.s32.totalorder %v626, 2
        %vm647 = vcmp.lt.s32.totalorder %v626, 3
        %vm648 = vcmp.lt.s32.totalorder %v626, 4
        %v649 = vsel %vm645, %v629, %v632
        %v650 = vsel %vm648, %v638, 2102212464
        %v651 = vsel %vm647, %v635, %v650
        %v652 = vsel %vm646, %v649, %v651
        %v653 = vsel %vm645, %v632, %v635
        %v654 = vsel %vm648, %v641, 920167782
        %v655 = vsel %vm647, %v638, %v654
        %v656 = vsel %vm646, %v653, %v655
        %v657 = vsel %vm645, %v635, %v638
        %v658 = vsel %vm648, %v644, 1326507024
        %v659 = vsel %vm647, %v641, %v658
        %v660 = vsel %vm646, %v657, %v659
        %v661 = vshll.u32 %v621, 8
        %v662 = vmul.u32.u64.compose %v661, %v660
        %v663 = vextract.low.u32 %v662
        %v664 = vextract.high.u32 %v662
        %v665 = vmul.u32.u64.compose %v661, %v656
        %v666 = vextract.low.u32 %v665
        %v667 = vextract.high.u32 %v665
        %v668 = vmul.u32 %v661, %v652
        %v669 = vadd.s32 %v664, %v666
        %vm670 = vc.u32 %v664, %v666
        %v671 = vadd.s32 %v667, 1
        %v672 = vsel %vm670, %v671, %v667
        %v673 = vadd.s32 %v668, %v672
        %v674 = vadd.s32 %v673, 536870912
        %v675 = vshrl.u32 %v674, 30
        %v676 = vshll.u32 %v675, 30
        %v677 = vsub.s32 %v673, %v676
        %vm678 = vcmp.lt.s32.totalorder %v677, 0
        %v679 = vsub.s32 0, %v677
        %v680 = vsel %vm678, %v679, %v677
        %v681 = vclz %v680
        %v682 = vsub.s32 %v681, 2
        %vm683 = vcmp.gt.s32.totalorder 0, %v682
        %v684 = vsel %vm683, 0, %v682
        %v685 = vsub.s32 32, %v684
        %v686 = vshll.u32 %v677, %v684
        %v687 = vshrl.u32 %v669, %v685
        %v688 = vor.u32 %v686, %v687
        %v689 = vsub.s32 4294967266, %v684
        %v690 = vadd.s32 %v689, 127
        %v691 = vshll.u32 %v690, 23
        %v692 = vor.u32 4788187, %v691
        %v693 = vand.u32 2147483647, %v692
        %v695 = vcvt.s32.f32 %v688
        %v696 = vmul.f32 %v695, %v693
        %v697 = vxor.u32 %v696, 2147483648
        %v698 = vsel %vm615, %v697, %v696
        %v699 = vsub.s32 4, %v675
        %v700 = vsel %vm615, %v699, %v675
        %v701 = vsel %vm614, %v296, %v698
        %v702 = vsel %vm614, 0, %v700
        %v703 = vcosq.f32.pop %v701
        %v704 = vsinq.f32.pop %v701
        %vm705 = vweird.f32 %v296
        %v706 = vadd.s32 %v702, 3
        %v707 = vand.u32 %v706, 3
        %vm708 = vcmp.lt.s32.totalorder %v707, 2
        %vm709 = vcmp.eq.s32.totalorder %v707, 0
        %v710 = vxor.u32 %v704, 2147483648
        %v711 = vsel %vm709, %v703, %v710
        %vm712 = vcmp.eq.s32.totalorder %v707, 2
        %v713 = vxor.u32 %v703, 2147483648
        %v714 = vsel %vm712, %v713, %v704
        %v715 = vsel %vm708, %v711, %v714
        %v716 = vsel %vm705, nan, %v715
        %v717 = vand.u32 2147483647, %v297
        %vm718 = vcmp.le.f32.partialorder %v717, 0.7853982
        %vm719 = vcmp.lt.s32.totalorder %v297, 0
        %v720 = vand.u32 %v297, 2139095040
        %v721 = vshrl.u32 %v720, 23
        %v722 = vsub.s32 %v721, 127
        %v723 = vand.u32 2147483647, %v297
        %v724 = vand.u32 %v723, 8388607
        %v725 = vor.u32 %v724, 8388608
        %v726 = vsub.s32 0, %v725
        %v727 = vadd.s32 %v722, 1
        %vm728 = vcmp.gt.s32.totalorder %v727, 0
        %v729 = vsel %vm728, %v727, 0
        %v730 = vshrl.u32 %v729, 5
        %v731 = vand.u32 %v729, 31
        %v732 = vsub.s32 32, %v731
        %v733 = vshrl.u32 683565275, %v732
        %v734 = vshll.u32 683565275, %v731
        %v735 = vshrl.u32 2475754826, %v732
        %v736 = vor.u32 %v734, %v735
        %v737 = vshll.u32 2475754826, %v731
        %v738 = vshrl.u32 2131351028, %v732
        %v739 = vor.u32 %v737, %v738
        %v740 = vshll.u32 2131351028, %v731
        %v741 = vshrl.u32 2102212464, %v732
        %v742 = vor.u32 %v740, %v741
        %v743 = vshll.u32 2102212464, %v731
        %v744 = vshrl.u32 920167782, %v732
        %v745 = vor.u32 %v743, %v744
        %v746 = vshll.u32 920167782, %v731
        %v747 = vshrl.u32 1326507024, %v732
        %v748 = vor.u32 %v746, %v747
        %vm749 = vcmp.lt.s32.totalorder %v730, 1
        %vm750 = vcmp.lt.s32.totalorder %v730, 2
        %vm751 = vcmp.lt.s32.totalorder %v730, 3
        %vm752 = vcmp.lt.s32.totalorder %v730, 4
        %v753 = vsel %vm749, %v733, %v736
        %v754 = vsel %vm752, %v742, 2102212464
        %v755 = vsel %vm751, %v739, %v754
        %v756 = vsel %vm750, %v753, %v755
        %v757 = vsel %vm749, %v736, %v739
        %v758 = vsel %vm752, %v745, 920167782
        %v759 = vsel %vm751, %v742, %v758
        %v760 = vsel %vm750, %v757, %v759
        %v761 = vsel %vm749, %v739, %v742
        %v762 = vsel %vm752, %v748, 1326507024
        %v763 = vsel %vm751, %v745, %v762
        %v764 = vsel %vm750, %v761, %v763
        %v765 = vshll.u32 %v725, 8
        %v766 = vmul.u32.u64.compose %v765, %v764
        %v767 = vextract.low.u32 %v766
        %v768 = vextract.high.u32 %v766
        %v769 = vmul.u32.u64.compose %v765, %v760
        %v770 = vextract.low.u32 %v769
        %v771 = vextract.high.u32 %v769
        %v772 = vmul.u32 %v765, %v756
        %v773 = vadd.s32 %v768, %v770
        %vm774 = vc.u32 %v768, %v770
        %v775 = vadd.s32 %v771, 1
        %v776 = vsel %vm774, %v775, %v771
        %v777 = vadd.s32 %v772, %v776
        %v778 = vadd.s32 %v777, 536870912
        %v779 = vshrl.u32 %v778, 30
        %v780 = vshll.u32 %v779, 30
        %v781 = vsub.s32 %v777, %v780
        %vm782 = vcmp.lt.s32.totalorder %v781, 0
        %v783 = vsub.s32 0, %v781
        %v784 = vsel %vm782, %v783, %v781
        %v785 = vclz %v784
        %v786 = vsub.s32 %v785, 2
        %vm787 = vcmp.gt.s32.totalorder 0, %v786
        %v788 = vsel %vm787, 0, %v786
        %v789 = vsub.s32 32, %v788
        %v790 = vshll.u32 %v781, %v788
        %v791 = vshrl.u32 %v773, %v789
        %v792 = vor.u32 %v790, %v791
        %v793 = vsub.s32 4294967266, %v788
        %v794 = vadd.s32 %v793, 127
        %v795 = vshll.u32 %v794, 23
        %v796 = vor.u32 4788187, %v795
        %v797 = vand.u32 2147483647, %v796
        %v799 = vcvt.s32.f32 %v792
        %v800 = vmul.f32 %v799, %v797
        %v801 = vxor.u32 %v800, 2147483648
        %v802 = vsel %vm719, %v801, %v800
        %v803 = vsub.s32 4, %v779
        %v804 = vsel %vm719, %v803, %v779
        %v805 = vsel %vm718, %v297, %v802
        %v806 = vsel %vm718, 0, %v804
        %v807 = vcosq.f32.pop %v805
        %v808 = vsinq.f32.pop %v805
        %vm809 = vweird.f32 %v297
        %v810 = vadd.s32 %v806, 3
        %v811 = vand.u32 %v810, 3
        %vm812 = vcmp.lt.s32.totalorder %v811, 2
        %vm813 = vcmp.eq.s32.totalorder %v811, 0
        %v814 = vxor.u32 %v808, 2147483648
        %v815 = vsel %vm813, %v807, %v814
        %vm816 = vcmp.eq.s32.totalorder %v811, 2
        %v817 = vxor.u32 %v807, 2147483648
        %v818 = vsel %vm816, %v817, %v808
        %v819 = vsel %vm812, %v815, %v818
        %v820 = vsel %vm809, nan, %v819
        %v821 = vand.u32 2147483647, %v298
        %vm822 = vcmp.le.f32.partialorder %v821, 0.7853982
        %vm823 = vcmp.lt.s32.totalorder %v298, 0
        %v824 = vand.u32 %v298, 2139095040
        %v825 = vshrl.u32 %v824, 23
        %v826 = vsub.s32 %v825, 127
        %v827 = vand.u32 2147483647, %v298
        %v828 = vand.u32 %v827, 8388607
        %v829 = vor.u32 %v828, 8388608
        %v830 = vsub.s32 0, %v829
        %v831 = vadd.s32 %v826, 1
        %vm832 = vcmp.gt.s32.totalorder %v831, 0
        %v833 = vsel %vm832, %v831, 0
        %v834 = vshrl.u32 %v833, 5
        %v835 = vand.u32 %v833, 31
        %v836 = vsub.s32 32, %v835
        %v837 = vshrl.u32 683565275, %v836
        %v838 = vshll.u32 683565275, %v835
        %v839 = vshrl.u32 2475754826, %v836
        %v840 = vor.u32 %v838, %v839
        %v841 = vshll.u32 2475754826, %v835
        %v842 = vshrl.u32 2131351028, %v836
        %v843 = vor.u32 %v841, %v842
        %v844 = vshll.u32 2131351028, %v835
        %v845 = vshrl.u32 2102212464, %v836
        %v846 = vor.u32 %v844, %v845
        %v847 = vshll.u32 2102212464, %v835
        %v848 = vshrl.u32 920167782, %v836
        %v849 = vor.u32 %v847, %v848
        %v850 = vshll.u32 920167782, %v835
        %v851 = vshrl.u32 1326507024, %v836
        %v852 = vor.u32 %v850, %v851
        %vm853 = vcmp.lt.s32.totalorder %v834, 1
        %vm854 = vcmp.lt.s32.totalorder %v834, 2
        %vm855 = vcmp.lt.s32.totalorder %v834, 3
        %vm856 = vcmp.lt.s32.totalorder %v834, 4
        %v857 = vsel %vm853, %v837, %v840
        %v858 = vsel %vm856, %v846, 2102212464
        %v859 = vsel %vm855, %v843, %v858
        %v860 = vsel %vm854, %v857, %v859
        %v861 = vsel %vm853, %v840, %v843
        %v862 = vsel %vm856, %v849, 920167782
        %v863 = vsel %vm855, %v846, %v862
        %v864 = vsel %vm854, %v861, %v863
        %v865 = vsel %vm853, %v843, %v846
        %v866 = vsel %vm856, %v852, 1326507024
        %v867 = vsel %vm855, %v849, %v866
        %v868 = vsel %vm854, %v865, %v867
        %v869 = vshll.u32 %v829, 8
        %v870 = vmul.u32.u64.compose %v869, %v868
        %v871 = vextract.low.u32 %v870
        %v872 = vextract.high.u32 %v870
        %v873 = vmul.u32.u64.compose %v869, %v864
        %v874 = vextract.low.u32 %v873
        %v875 = vextract.high.u32 %v873
        %v876 = vmul.u32 %v869, %v860
        %v877 = vadd.s32 %v872, %v874
        %vm878 = vc.u32 %v872, %v874
        %v879 = vadd.s32 %v875, 1
        %v880 = vsel %vm878, %v879, %v875
        %v881 = vadd.s32 %v876, %v880
        %v882 = vadd.s32 %v881, 536870912
        %v883 = vshrl.u32 %v882, 30
        %v884 = vshll.u32 %v883, 30
        %v885 = vsub.s32 %v881, %v884
        %vm886 = vcmp.lt.s32.totalorder %v885, 0
        %v887 = vsub.s32 0, %v885
        %v888 = vsel %vm886, %v887, %v885
        %v889 = vclz %v888
        %v890 = vsub.s32 %v889, 2
        %vm891 = vcmp.gt.s32.totalorder 0, %v890
        %v892 = vsel %vm891, 0, %v890
        %v893 = vsub.s32 32, %v892
        %v894 = vshll.u32 %v885, %v892
        %v895 = vshrl.u32 %v877, %v893
        %v896 = vor.u32 %v894, %v895
        %v897 = vsub.s32 4294967266, %v892
        %v898 = vadd.s32 %v897, 127
        %v899 = vshll.u32 %v898, 23
        %v900 = vor.u32 4788187, %v899
        %v901 = vand.u32 2147483647, %v900
        %v903 = vcvt.s32.f32 %v896
        %v904 = vmul.f32 %v903, %v901
        %v905 = vxor.u32 %v904, 2147483648
        %v906 = vsel %vm823, %v905, %v904
        %v907 = vsub.s32 4, %v883
        %v908 = vsel %vm823, %v907, %v883
        %v909 = vsel %vm822, %v298, %v906
        %v910 = vsel %vm822, 0, %v908
        %v911 = vcosq.f32.pop %v909
        %v912 = vsinq.f32.pop %v909
        %vm913 = vweird.f32 %v298
        %v914 = vadd.s32 %v910, 3
        %v915 = vand.u32 %v914, 3
        %vm916 = vcmp.lt.s32.totalorder %v915, 2
        %vm917 = vcmp.eq.s32.totalorder %v915, 0
        %v918 = vxor.u32 %v912, 2147483648
        %v919 = vsel %vm917, %v911, %v918
        %vm920 = vcmp.eq.s32.totalorder %v915, 2
        %v921 = vxor.u32 %v911, 2147483648
        %v922 = vsel %vm920, %v921, %v912
        %v923 = vsel %vm916, %v919, %v922
        %v924 = vsel %vm913, nan, %v923
        %v925 = vand.u32 2147483647, %v299
        %vm926 = vcmp.le.f32.partialorder %v925, 0.7853982
        %vm927 = vcmp.lt.s32.totalorder %v299, 0
        %v928 = vand.u32 %v299, 2139095040
        %v929 = vshrl.u32 %v928, 23
        %v930 = vsub.s32 %v929, 127
        %v931 = vand.u32 2147483647, %v299
        %v932 = vand.u32 %v931, 8388607
        %v933 = vor.u32 %v932, 8388608
        %v934 = vsub.s32 0, %v933
        %v935 = vadd.s32 %v930, 1
        %vm936 = vcmp.gt.s32.totalorder %v935, 0
        %v937 = vsel %vm936, %v935, 0
        %v938 = vshrl.u32 %v937, 5
        %v939 = vand.u32 %v937, 31
        %v940 = vsub.s32 32, %v939
        %v941 = vshrl.u32 683565275, %v940
        %v942 = vshll.u32 683565275, %v939
        %v943 = vshrl.u32 2475754826, %v940
        %v944 = vor.u32 %v942, %v943
        %v945 = vshll.u32 2475754826, %v939
        %v946 = vshrl.u32 2131351028, %v940
        %v947 = vor.u32 %v945, %v946
        %v948 = vshll.u32 2131351028, %v939
        %v949 = vshrl.u32 2102212464, %v940
        %v950 = vor.u32 %v948, %v949
        %v951 = vshll.u32 2102212464, %v939
        %v952 = vshrl.u32 920167782, %v940
        %v953 = vor.u32 %v951, %v952
        %v954 = vshll.u32 920167782, %v939
        %v955 = vshrl.u32 1326507024, %v940
        %v956 = vor.u32 %v954, %v955
        %vm957 = vcmp.lt.s32.totalorder %v938, 1
        %vm958 = vcmp.lt.s32.totalorder %v938, 2
        %vm959 = vcmp.lt.s32.totalorder %v938, 3
        %vm960 = vcmp.lt.s32.totalorder %v938, 4
        %v961 = vsel %vm957, %v941, %v944
        %v962 = vsel %vm960, %v950, 2102212464
        %v963 = vsel %vm959, %v947, %v962
        %v964 = vsel %vm958, %v961, %v963
        %v965 = vsel %vm957, %v944, %v947
        %v966 = vsel %vm960, %v953, 920167782
        %v967 = vsel %vm959, %v950, %v966
        %v968 = vsel %vm958, %v965, %v967
        %v969 = vsel %vm957, %v947, %v950
        %v970 = vsel %vm960, %v956, 1326507024
        %v971 = vsel %vm959, %v953, %v970
        %v972 = vsel %vm958, %v969, %v971
        %v973 = vshll.u32 %v933, 8
        %v974 = vmul.u32.u64.compose %v973, %v972
        %v975 = vextract.low.u32 %v974
        %v976 = vextract.high.u32 %v974
        %v977 = vmul.u32.u64.compose %v973, %v968
        %v978 = vextract.low.u32 %v977
        %v979 = vextract.high.u32 %v977
        %v980 = vmul.u32 %v973, %v964
        %v981 = vadd.s32 %v976, %v978
        %vm982 = vc.u32 %v976, %v978
        %v983 = vadd.s32 %v979, 1
        %v984 = vsel %vm982, %v983, %v979
        %v985 = vadd.s32 %v980, %v984
        %v986 = vadd.s32 %v985, 536870912
        %v987 = vshrl.u32 %v986, 30
        %v988 = vshll.u32 %v987, 30
        %v989 = vsub.s32 %v985, %v988
        %vm990 = vcmp.lt.s32.totalorder %v989, 0
        %v991 = vsub.s32 0, %v989
        %v992 = vsel %vm990, %v991, %v989
        %v993 = vclz %v992
        %v994 = vsub.s32 %v993, 2
        %vm995 = vcmp.gt.s32.totalorder 0, %v994
        %v996 = vsel %vm995, 0, %v994
        %v997 = vsub.s32 32, %v996
        %v998 = vshll.u32 %v989, %v996
        %v999 = vshrl.u32 %v981, %v997
        %v1000 = vor.u32 %v998, %v999
        %v1001 = vsub.s32 4294967266, %v996
        %v1002 = vadd.s32 %v1001, 127
        %v1003 = vshll.u32 %v1002, 23
        %v1004 = vor.u32 4788187, %v1003
        %v1005 = vand.u32 2147483647, %v1004
        %v1007 = vcvt.s32.f32 %v1000
        %v1008 = vmul.f32 %v1007, %v1005
        %v1009 = vxor.u32 %v1008, 2147483648
        %v1010 = vsel %vm927, %v1009, %v1008
        %v1011 = vsub.s32 4, %v987
        %v1012 = vsel %vm927, %v1011, %v987
        %v1013 = vsel %vm926, %v299, %v1010
        %v1014 = vsel %vm926, 0, %v1012
        %v1015 = vcosq.f32.pop %v1013
        %v1016 = vsinq.f32.pop %v1013
        %vm1017 = vweird.f32 %v299
        %v1018 = vadd.s32 %v1014, 3
        %v1019 = vand.u32 %v1018, 3
        %vm1020 = vcmp.lt.s32.totalorder %v1019, 2
        %vm1021 = vcmp.eq.s32.totalorder %v1019, 0
        %v1022 = vxor.u32 %v1016, 2147483648
        %v1023 = vsel %vm1021, %v1015, %v1022
        %vm1024 = vcmp.eq.s32.totalorder %v1019, 2
        %v1025 = vxor.u32 %v1015, 2147483648
        %v1026 = vsel %vm1024, %v1025, %v1016
        %v1027 = vsel %vm1020, %v1023, %v1026
        %v1028 = vsel %vm1017, nan, %v1027
        %v1029 = vand.u32 2147483647, %v300
        %vm1030 = vcmp.le.f32.partialorder %v1029, 0.7853982
        %vm1031 = vcmp.lt.s32.totalorder %v300, 0
        %v1032 = vand.u32 %v300, 2139095040
        %v1033 = vshrl.u32 %v1032, 23
        %v1034 = vsub.s32 %v1033, 127
        %v1035 = vand.u32 2147483647, %v300
        %v1036 = vand.u32 %v1035, 8388607
        %v1037 = vor.u32 %v1036, 8388608
        %v1038 = vsub.s32 0, %v1037
        %v1039 = vadd.s32 %v1034, 1
        %vm1040 = vcmp.gt.s32.totalorder %v1039, 0
        %v1041 = vsel %vm1040, %v1039, 0
        %v1042 = vshrl.u32 %v1041, 5
        %v1043 = vand.u32 %v1041, 31
        %v1044 = vsub.s32 32, %v1043
        %v1045 = vshrl.u32 683565275, %v1044
        %v1046 = vshll.u32 683565275, %v1043
        %v1047 = vshrl.u32 2475754826, %v1044
        %v1048 = vor.u32 %v1046, %v1047
        %v1049 = vshll.u32 2475754826, %v1043
        %v1050 = vshrl.u32 2131351028, %v1044
        %v1051 = vor.u32 %v1049, %v1050
        %v1052 = vshll.u32 2131351028, %v1043
        %v1053 = vshrl.u32 2102212464, %v1044
        %v1054 = vor.u32 %v1052, %v1053
        %v1055 = vshll.u32 2102212464, %v1043
        %v1056 = vshrl.u32 920167782, %v1044
        %v1057 = vor.u32 %v1055, %v1056
        %v1058 = vshll.u32 920167782, %v1043
        %v1059 = vshrl.u32 1326507024, %v1044
        %v1060 = vor.u32 %v1058, %v1059
        %vm1061 = vcmp.lt.s32.totalorder %v1042, 1
        %vm1062 = vcmp.lt.s32.totalorder %v1042, 2
        %vm1063 = vcmp.lt.s32.totalorder %v1042, 3
        %vm1064 = vcmp.lt.s32.totalorder %v1042, 4
        %v1065 = vsel %vm1061, %v1045, %v1048
        %v1066 = vsel %vm1064, %v1054, 2102212464
        %v1067 = vsel %vm1063, %v1051, %v1066
        %v1068 = vsel %vm1062, %v1065, %v1067
        %v1069 = vsel %vm1061, %v1048, %v1051
        %v1070 = vsel %vm1064, %v1057, 920167782
        %v1071 = vsel %vm1063, %v1054, %v1070
        %v1072 = vsel %vm1062, %v1069, %v1071
        %v1073 = vsel %vm1061, %v1051, %v1054
        %v1074 = vsel %vm1064, %v1060, 1326507024
        %v1075 = vsel %vm1063, %v1057, %v1074
        %v1076 = vsel %vm1062, %v1073, %v1075
        %v1077 = vshll.u32 %v1037, 8
        %v1078 = vmul.u32.u64.compose %v1077, %v1076
        %v1079 = vextract.low.u32 %v1078
        %v1080 = vextract.high.u32 %v1078
        %v1081 = vmul.u32.u64.compose %v1077, %v1072
        %v1082 = vextract.low.u32 %v1081
        %v1083 = vextract.high.u32 %v1081
        %v1084 = vmul.u32 %v1077, %v1068
        %v1085 = vadd.s32 %v1080, %v1082
        %vm1086 = vc.u32 %v1080, %v1082
        %v1087 = vadd.s32 %v1083, 1
        %v1088 = vsel %vm1086, %v1087, %v1083
        %v1089 = vadd.s32 %v1084, %v1088
        %v1090 = vadd.s32 %v1089, 536870912
        %v1091 = vshrl.u32 %v1090, 30
        %v1092 = vshll.u32 %v1091, 30
        %v1093 = vsub.s32 %v1089, %v1092
        %vm1094 = vcmp.lt.s32.totalorder %v1093, 0
        %v1095 = vsub.s32 0, %v1093
        %v1096 = vsel %vm1094, %v1095, %v1093
        %v1097 = vclz %v1096
        %v1098 = vsub.s32 %v1097, 2
        %vm1099 = vcmp.gt.s32.totalorder 0, %v1098
        %v1100 = vsel %vm1099, 0, %v1098
        %v1101 = vsub.s32 32, %v1100
        %v1102 = vshll.u32 %v1093, %v1100
        %v1103 = vshrl.u32 %v1085, %v1101
        %v1104 = vor.u32 %v1102, %v1103
        %v1105 = vsub.s32 4294967266, %v1100
        %v1106 = vadd.s32 %v1105, 127
        %v1107 = vshll.u32 %v1106, 23
        %v1108 = vor.u32 4788187, %v1107
        %v1109 = vand.u32 2147483647, %v1108
        %v1111 = vcvt.s32.f32 %v1104
        %v1112 = vmul.f32 %v1111, %v1109
        %v1113 = vxor.u32 %v1112, 2147483648
        %v1114 = vsel %vm1031, %v1113, %v1112
        %v1115 = vsub.s32 4, %v1091
        %v1116 = vsel %vm1031, %v1115, %v1091
        %v1117 = vsel %vm1030, %v300, %v1114
        %v1118 = vsel %vm1030, 0, %v1116
        %v1119 = vcosq.f32.pop %v1117
        %v1120 = vsinq.f32.pop %v1117
        %vm1121 = vweird.f32 %v300
        %v1122 = vadd.s32 %v1118, 3
        %v1123 = vand.u32 %v1122, 3
        %vm1124 = vcmp.lt.s32.totalorder %v1123, 2
        %vm1125 = vcmp.eq.s32.totalorder %v1123, 0
        %v1126 = vxor.u32 %v1120, 2147483648
        %v1127 = vsel %vm1125, %v1119, %v1126
        %vm1128 = vcmp.eq.s32.totalorder %v1123, 2
        %v1129 = vxor.u32 %v1119, 2147483648
        %v1130 = vsel %vm1128, %v1129, %v1120
        %v1131 = vsel %vm1124, %v1127, %v1130
        %v1132 = vsel %vm1121, nan, %v1131
        %1133 = vst [vmem:[%s164] sm:$0xff] %v404
        %1134 = vst [vmem:[%s164 + $0x8] sm:$0xff] %v508
        %1135 = vst [vmem:[%s164 + $0x10] sm:$0xff] %v612
        %1136 = vst [vmem:[%s164 + $0x18] sm:$0xff] %v716
        %1137 = vst [vmem:[%s164 + $0x20] sm:$0xff] %v820
        %1138 = vst [vmem:[%s164 + $0x28] sm:$0xff] %v924
        %1139 = vst [vmem:[%s164 + $0x30] sm:$0xff] %v1028
        %1140 = vst [vmem:[%s164 + $0x38] sm:$0xff] %v1132
        %s1141 = sand.u32 %s93, 1
        %s1142 = scalar_lea.sflag [#allocation3], %s1141
        %s1143 = sand.u32 %s93, 1
        %s1144 = smul.addr %s1143, 64
        %s1145 = scalar_lea.vmem [#allocation2], %s1144
        // Predicated region
        $region33: #{tpu_custom_call.1} parent=31 // pred_check
          %p1146 = pneg %p103
        $region34: #{tpu_custom_call.1} parent=31 // pred_check_branch
          %1148 = sbr.rel (%p1146) target = $region36
        $region35: #{tpu_custom_call.1} parent=31 // pred_region
          %s1149 = smul.u32 8, %s17
          %s1151 = ssub.s32 1024, 1024
          %1152 = vsyncadd %s1142, %s1151
          %s1153 = smul.addr %s1149, 128
          %s1154 = scalar_lea.hbm %s3, %s1153
          %s1155 = sshll.u32 %s1145, 4
          %s1156 = int_to_ptr.vmem [resolvable:$true] %s1155
          %1161 = dma.vmem_to_hbm [thread:$0]  %s1156, 1024, %s1154, %s1142, 128, 128, 8
        $region36: #{tpu_custom_call.1} parent=31 // pred_fallthru
          _
      $region32: #{tpu_custom_call.1} parent=5 // pred_fallthru
        _
      %p1162 = scmp.le.s32.totalorder 2, %s12
      // Predicated region
      $region37: #{tpu_custom_call.1} parent=5 // pred_check
        %p1163 = pneg %p1162
      $region38: #{tpu_custom_call.1} parent=5 // pred_check_branch
        %1165 = sbr.rel (%p1163) target = $region40
      $region39: #{tpu_custom_call.1} parent=5 // pred_region
        %s1166 = ssub.s32 %s12, 2
        // Predicated region
        $region41: #{tpu_custom_call.1} parent=39 // pred_check
          %p1167 = pneg %p109
        $region42: #{tpu_custom_call.1} parent=39 // pred_check_branch
          %1169 = sbr.rel (%p1167) target = $region44
        $region43: #{tpu_custom_call.1} parent=39 // pred_region
          %s1170 = sand.u32 %s94, 1
          %s1171 = scalar_lea.sflag [#allocation3], %s1170
          %s1172 = sand.u32 %s94, 1
          %s1173 = smul.addr %s1172, 64
          %s1174 = scalar_lea.vmem [#allocation2], %s1173
          %1175 = dma.done %s1171, 1024
        $region44: #{tpu_custom_call.1} parent=39 // pred_fallthru
          _
      $region40: #{tpu_custom_call.1} parent=5 // pred_fallthru
        _
    $region6: #{tpu_custom_call.1} parent=1 // loop_footer
      %s16 = sadd.s32 1, %s12
    $region7: #{tpu_custom_call.1} parent=1 // loop_footer_branch
      %11 = sbr.rel target = $region3
    $region8: #{tpu_custom_call.1} parent=1 // loop_exit
      _
    %1176 = vsyncpa [#allocation3], 1
    %s1177 = scalar_lea.sflag [#allocation3], 1
    %1178 = vsyncpa %s1177, 1

</llo_original>
